<compile_context>
chip_gen: v6e
topology: v6e:2x2x1
jax: 0.10.0
libtpu: 0.0.40
codegen_flags: <defaults>
</compile_context>

<pallas_src>
import functools

import jax
import jax.numpy as jnp
from jax.experimental import pallas as pl
from jax.experimental.pallas import tpu as pltpu

LANES = 128              # vreg lane width
SUBLANES = 8             # vreg sublane depth
ACC_ROWS_MAX = 64        # accumulator depth (8 vregs) -> breaks the serial add chain
TARGET_TILE_BYTES = 4 << 20   # per input, per pipeline buffer
SPLIT_MIN_ROWS = 4096    # minimum rows before using the 2-way (megacore) split


def _round_up(v, m):
    return ((v + m - 1) // m) * m


def _dissection_kernel(x_ref, t_ref, prod_acc_ref, t_acc_ref, *,
                       rows, tile_rows, tiles_per_split, acc_rows, needs_mask):
    """Streaming reduction.

    x_ref, t_ref   : (tile_rows, LANES) VMEM tiles of input / target
    prod_acc_ref   : (1, acc_rows, LANES) f32 resident output block, partial
                     sum of input * target for this split
    t_acc_ref      : (1, acc_rows, LANES) f32 resident output block, partial
                     sum of target for this split
    """
    p = pl.program_id(0)   # split index ("parallel" -> one per TensorCore on v7x)
    i = pl.program_id(1)   # tile index within the split ("arbitrary")

    @pl.when(i == 0)
    def _init():
        prod_acc_ref[...] = jnp.zeros_like(prod_acc_ref)
        t_acc_ref[...] = jnp.zeros_like(t_acc_ref)

    x = x_ref[...].astype(jnp.float32)
    t = t_ref[...].astype(jnp.float32)

    def accumulate(prod, tv):
        # (tile_rows, 128) -> (k, acc_rows, 128); reducing the leading axis is
        # pure vreg-wise VPU adds with acc_rows/8 independent chains (no XLU
        # work and no long dependent chain in the streaming loop).
        prod_acc_ref[0] += jnp.sum(prod.reshape(-1, acc_rows, LANES), axis=0)
        t_acc_ref[0] += jnp.sum(tv.reshape(-1, acc_rows, LANES), axis=0)

    if needs_mask:
        gidx = p * tiles_per_split + i
        is_full = (gidx + 1) * tile_rows <= rows

        @pl.when(is_full)
        def _full_tile():
            accumulate(x * t, t)

        @pl.when(jnp.logical_not(is_full))
        def _boundary_tile():
            # Rows past `rows` are undefined (partial boundary block) or
            # belong to a fully re-read (clamped) tile; mask them out.  Keep
            # the select form: x*t on undefined rows may be NaN/Inf and
            # jnp.where discards it.
            remaining = rows - gidx * tile_rows
            row_ids = jax.lax.broadcasted_iota(jnp.int32, (tile_rows, LANES), 0)
            mask = row_ids < remaining
            accumulate(jnp.where(mask, x * t, 0.0), jnp.where(mask, t, 0.0))
    else:
        accumulate(x * t, t)


@jax.jit
def dissection_loss(inputs, target):
    """Pallas implementation of DissectionLoss.forward."""
    assert inputs.shape == target.shape, "input/target shapes must match"

    x = jnp.ravel(inputs)
    t = jnp.ravel(target)
    n = x.shape[0]
    if n == 0:
        return jnp.float32(0.0)

    # Common case: n % 128 == 0 -> layout-preserving reshape, zero copies.
    rem = n % LANES
    if rem:
        # Rare path; pays one full copy of both arrays.
        pad = LANES - rem
        x = jnp.pad(x, (0, pad))
        t = jnp.pad(t, (0, pad))
    rows = x.shape[0] // LANES
    x2 = x.reshape(rows, LANES)
    t2 = t.reshape(rows, LANES)

    x_item = jnp.dtype(x2.dtype).itemsize
    t_item = jnp.dtype(t2.dtype).itemsize

    if rows < ACC_ROWS_MAX:
        # Tiny input: single tile equal to the full array (no (8,128)
        # divisibility requirement when block == full dims).
        num_splits, tiles_per_split = 1, 1
        tile_rows = rows
        acc_rows = rows
    else:
        max_item = max(x_item, t_item)
        # Largest tile (multiple of 64 rows; also satisfies bf16/int8 sublane
        # packing) within the per-buffer byte budget.
        max_tile_rows = max(
            ACC_ROWS_MAX,
            (TARGET_TILE_BYTES // (LANES * max_item)) // ACC_ROWS_MAX * ACC_ROWS_MAX)
        tile0 = min(max_tile_rows, rows // ACC_ROWS_MAX * ACC_ROWS_MAX)
        total_tiles = pl.cdiv(rows, tile0)
        # 2-way split -> one half of the rows per TensorCore on v7x; the extra
        # size-2 "parallel" axis is a harmless sequential loop on v5e/v6e.
        num_splits = 2 if rows >= SPLIT_MIN_ROWS else 1
        tiles_per_split = pl.cdiv(total_tiles, num_splits)
        grid_tiles = num_splits * tiles_per_split
        # Re-balance so both splits get (nearly) equal row counts; tile never
        # exceeds the array so boundary blocks are ordinary partial blocks.
        tile_rows = min(tile0, _round_up(pl.cdiv(rows, grid_tiles), ACC_ROWS_MAX))
        acc_rows = ACC_ROWS_MAX

    grid_tiles = num_splits * tiles_per_split
    needs_mask = (grid_tiles * tile_rows) != rows
    # Can any grid tile be entirely past the end of the array? (Statically
    # known; only possible in extreme row counts.)  If so, clamp its DMA to
    # the last real tile; the in-kernel mask zeroes its contribution.
    has_oob_tiles = (grid_tiles - 1) * tile_rows >= rows
    if has_oob_tiles:
        last_tile = pl.cdiv(rows, tile_rows) - 1

        def data_map(p, i):
            return (jnp.minimum(p * tiles_per_split + i, last_tile), 0)
    else:
        def data_map(p, i):
            return (p * tiles_per_split + i, 0)

    def out_map(p, i):
        return (p, 0, 0)

    kernel = functools.partial(
        _dissection_kernel,
        rows=rows,
        tile_rows=tile_rows,
        tiles_per_split=tiles_per_split,
        acc_rows=acc_rows,
        needs_mask=needs_mask,
    )

    # Double-buffered inputs + two f32 partial-sum output blocks + headroom.
    vmem_limit = int(2 * tile_rows * LANES * (x_item + t_item)
                     + 4 * acc_rows * LANES * 4
                     + (8 << 20))

    prod_part, t_part = pl.pallas_call(
        kernel,
        out_shape=(
            jax.ShapeDtypeStruct((num_splits, acc_rows, LANES), jnp.float32),
            jax.ShapeDtypeStruct((num_splits, acc_rows, LANES), jnp.float32),
        ),
        grid_spec=pltpu.PrefetchScalarGridSpec(
            num_scalar_prefetch=0,
            grid=(num_splits, tiles_per_split),
            in_specs=[
                pl.BlockSpec((tile_rows, LANES), data_map),
                pl.BlockSpec((tile_rows, LANES), data_map),
            ],
            out_specs=(
                pl.BlockSpec((1, acc_rows, LANES), out_map),
                pl.BlockSpec((1, acc_rows, LANES), out_map),
            ),
        ),
        compiler_params=pltpu.CompilerParams(
            dimension_semantics=("parallel", "arbitrary"),
            vmem_limit_bytes=vmem_limit,
        ),
    )(x2, t2)

    # Tiny epilogue on (num_splits, acc_rows, 128) partials; keeps the kernel
    # loop free of XLU cross-lane reductions and lets both cores contribute.
    num = jnp.sum(prod_part)
    den = jnp.sum(t_part)
    return num / (den + 1e-8)


def _reference(inputs, target):
    """Pure-JAX reference matching the PyTorch module exactly."""
    overlap = (inputs * target).astype(jnp.float32)
    return overlap.sum() / (target.astype(jnp.float32).sum() + 1e-8)


if __name__ == "__main__":
    key = jax.random.PRNGKey(0)
    k1, k2 = jax.random.split(key)

    # Small NCHW-like shapes, consistent with a segmentation-style loss.
    x = jax.random.uniform(k1, (2, 4, 16, 16), dtype=jnp.float32)
    # target: a binary-ish mask, as typical for dissection losses.
    tgt = (jax.random.uniform(k2, (2, 4, 16, 16)) > 0.5).astype(jnp.float32)

    loss = dissection_loss(x, tgt)
    loss = jax.block_until_ready(loss)

    ref = _reference(x, tgt)
    assert jnp.allclose(loss, ref, rtol=1e-5, atol=1e-6), (loss, ref)

    print("KERNEL_OK")
</pallas_src>

<mosaic_0001>
module attributes {stable_mosaic.version = 11 : i64} {
  func.func @_dissection_kernel(%arg0: i32, %arg1: i32, %arg2: memref<16x128xf32, #tpu.memory_space<vmem>>, %arg3: memref<16x128xf32, #tpu.memory_space<vmem>>, %arg4: memref<1x16x128xf32, #tpu.memory_space<vmem>>, %arg5: memref<1x16x128xf32, #tpu.memory_space<vmem>>) attributes {dimension_semantics = [#tpu.dimension_semantics<parallel>, #tpu.dimension_semantics<arbitrary>], iteration_bounds = array<i64: 1, 1>, scalar_prefetch = 0 : i64, scratch_operands = 0 : i64, tpu.core_type = #tpu.core_type<tc>, window_params = [{transform_indices = @transform_0, window_bounds = array<i64: 16, 128>}, {transform_indices = @transform_1, window_bounds = array<i64: 16, 128>}, {transform_indices = @transform_2, window_bounds = array<i64: 1, 16, 128>}, {transform_indices = @transform_3, window_bounds = array<i64: 1, 16, 128>}]} {
    %c0_i32 = arith.constant 0 : i32
    %0 = arith.cmpi eq, %arg1, %c0_i32 : i32
    %1 = arith.extui %0 : i1 to i32
    %c0_i32_0 = arith.constant 0 : i32
    %2 = arith.cmpi ne, %1, %c0_i32_0 : i32
    scf.if %2 {
      %cst_17 = arith.constant 0.000000e+00 : f32
      %22 = vector.broadcast %cst_17 : f32 to vector<1x16x128xf32>
      %c0_18 = arith.constant 0 : index
      %c0_19 = arith.constant 0 : index
      %c0_20 = arith.constant 0 : index
      %23 = vector.load %arg4[%c0_18, %c0_19, %c0_20] : memref<1x16x128xf32, #tpu.memory_space<vmem>>, vector<1x16x128xf32>
      tpu.vector_store %arg4[%c0_18, %c0_19, %c0_20], %22 {strides = array<i32>} : memref<1x16x128xf32, #tpu.memory_space<vmem>>, vector<1x16x128xf32>,
      %cst_21 = arith.constant 0.000000e+00 : f32
      %24 = vector.broadcast %cst_21 : f32 to vector<1x16x128xf32>
      %c0_22 = arith.constant 0 : index
      %c0_23 = arith.constant 0 : index
      %c0_24 = arith.constant 0 : index
      %25 = vector.load %arg5[%c0_22, %c0_23, %c0_24] : memref<1x16x128xf32, #tpu.memory_space<vmem>>, vector<1x16x128xf32>
      tpu.vector_store %arg5[%c0_22, %c0_23, %c0_24], %24 {strides = array<i32>} : memref<1x16x128xf32, #tpu.memory_space<vmem>>, vector<1x16x128xf32>,
    } else {
    }
    %c0 = arith.constant 0 : index
    %c0_1 = arith.constant 0 : index
    %3 = vector.load %arg2[%c0, %c0_1] : memref<16x128xf32, #tpu.memory_space<vmem>>, vector<16x128xf32>
    %c0_2 = arith.constant 0 : index
    %c0_3 = arith.constant 0 : index
    %4 = vector.load %arg3[%c0_2, %c0_3] : memref<16x128xf32, #tpu.memory_space<vmem>>, vector<16x128xf32>
    %5 = arith.mulf %3, %4 : vector<16x128xf32>
    %c0_4 = arith.constant 0 : index
    %c0_5 = arith.constant 0 : index
    %c0_6 = arith.constant 0 : index
    %6 = vector.load %arg4[%c0_4, %c0_5, %c0_6] : memref<1x16x128xf32, #tpu.memory_space<vmem>>, vector<1x16x128xf32>
    %7 = vector.shape_cast %6 : vector<1x16x128xf32> to vector<16x128xf32>
    %8 = vector.shape_cast %5 : vector<16x128xf32> to vector<1x16x128xf32>
    %cst = arith.constant dense<0.000000e+00> : vector<16x128xf32>
    %9 = vector.multi_reduction <add>, %8, %cst [0] : vector<1x16x128xf32> to vector<16x128xf32>
    %10 = arith.addf %7, %9 : vector<16x128xf32>
    %c0_7 = arith.constant 0 : index
    %c0_8 = arith.constant 0 : index
    %c0_9 = arith.constant 0 : index
    %11 = vector.load %arg4[%c0_7, %c0_8, %c0_9] : memref<1x16x128xf32, #tpu.memory_space<vmem>>, vector<1x16x128xf32>
    %12 = vector.shape_cast %11 : vector<1x16x128xf32> to vector<16x128xf32>
    %13 = vector.shape_cast %10 : vector<16x128xf32> to vector<1x16x128xf32>
    tpu.vector_store %arg4[%c0_7, %c0_8, %c0_9], %13 {strides = array<i32>} : memref<1x16x128xf32, #tpu.memory_space<vmem>>, vector<1x16x128xf32>,
    %c0_10 = arith.constant 0 : index
    %c0_11 = arith.constant 0 : index
    %c0_12 = arith.constant 0 : index
    %14 = vector.load %arg5[%c0_10, %c0_11, %c0_12] : memref<1x16x128xf32, #tpu.memory_space<vmem>>, vector<1x16x128xf32>
    %15 = vector.shape_cast %14 : vector<1x16x128xf32> to vector<16x128xf32>
    %16 = vector.shape_cast %4 : vector<16x128xf32> to vector<1x16x128xf32>
    %cst_13 = arith.constant dense<0.000000e+00> : vector<16x128xf32>
    %17 = vector.multi_reduction <add>, %16, %cst_13 [0] : vector<1x16x128xf32> to vector<16x128xf32>
    %18 = arith.addf %15, %17 : vector<16x128xf32>
    %c0_14 = arith.constant 0 : index
    %c0_15 = arith.constant 0 : index
    %c0_16 = arith.constant 0 : index
    %19 = vector.load %arg5[%c0_14, %c0_15, %c0_16] : memref<1x16x128xf32, #tpu.memory_space<vmem>>, vector<1x16x128xf32>
    %20 = vector.shape_cast %19 : vector<1x16x128xf32> to vector<16x128xf32>
    %21 = vector.shape_cast %18 : vector<16x128xf32> to vector<1x16x128xf32>
    tpu.vector_store %arg5[%c0_14, %c0_15, %c0_16], %21 {strides = array<i32>} : memref<1x16x128xf32, #tpu.memory_space<vmem>>, vector<1x16x128xf32>,
    return
  }
  func.func @transform_0(%arg0: i32, %arg1: i32) -> (i32, i32) {
    %c1_i32 = arith.constant 1 : i32
    %0 = arith.muli %arg0, %c1_i32 : i32
    %1 = arith.addi %0, %arg1 : i32
    %c0_i32 = arith.constant 0 : i32
    %c0_i32_0 = arith.constant 0 : i32
    return %1, %c0_i32 : i32, i32
  }
  func.func @transform_1(%arg0: i32, %arg1: i32) -> (i32, i32) {
    %c1_i32 = arith.constant 1 : i32
    %0 = arith.muli %arg0, %c1_i32 : i32
    %1 = arith.addi %0, %arg1 : i32
    %c0_i32 = arith.constant 0 : i32
    %c0_i32_0 = arith.constant 0 : i32
    return %1, %c0_i32 : i32, i32
  }
  func.func @transform_2(%arg0: i32, %arg1: i32) -> (i32, i32, i32) {
    %c0_i32 = arith.constant 0 : i32
    %c0_i32_0 = arith.constant 0 : i32
    %c0_i32_1 = arith.constant 0 : i32
    return %arg0, %c0_i32, %c0_i32_0 : i32, i32, i32
  }
  func.func @transform_3(%arg0: i32, %arg1: i32) -> (i32, i32, i32) {
    %c0_i32 = arith.constant 0 : i32
    %c0_i32_0 = arith.constant 0 : i32
    %c0_i32_1 = arith.constant 0 : i32
    return %arg0, %c0_i32, %c0_i32_0 : i32, i32, i32
  }
}

</mosaic_0001>

<llo_original>
// kernel: dissection_loss.1
$region0: #{dissection_loss.1}
  #allocation0 [shape = 'u32[]', space=smem, size = 0x4, offset = 0x4, fixed_abs, tag = 'smem constant byte address 0x4 - core index']
  #allocation1 [shape = 'u32[144,128]{1,0:T(1,128)}', space=vmem, size = 0x12000, scoped, tag = 'internal scratch']
  %s0 = inlined_call_operand.vmem [shape: f32[16,128], index: 0, kind: input, shape index: {}]
  %s1 = inlined_call_operand.vmem [shape: f32[16,128], index: 1, kind: input, shape index: {}]
  %s2 = inlined_call_operand.vmem [shape: f32[1,16,128], index: 2, kind: output, shape index: {0}]
  %s3 = inlined_call_operand.vmem [shape: f32[1,16,128], index: 3, kind: output, shape index: {1}]
  %4 = xla_tuple %s2, %s3
  %s5 = sld [smem:[#allocation0]]
  $region30: #{dissection_loss.1} parent=0
    _
  %s7 = ssub.s32 1, %s5
  %s8 = scalar_select 0, %s7, %s5
  // Predicated region
  $region2: #{dissection_loss.1} parent=0 // pred_check
    _
  $region3: #{dissection_loss.1} parent=0 // pred_check_branch
    %10 = sbr.rel (0) target = $region5
  $region4: #{dissection_loss.1} parent=0 // pred_region
    %s11 = sadd.s32 0, 0
    %s12 = smul.u32 2, %s11
    %p13 = scmp.lt.s32.totalorder %s12, 1
    %s14 = scalar_select %p13, %s12, 1
    %s15 = smul.addr %s14, 8
    %s16 = scalar_lea.vmem %s0, %s15
    %s17 = sadd.s32 0, 0
    %s18 = smul.u32 2, %s17
  $region5: #{dissection_loss.1} parent=0 // pred_fallthru
    _
  // Predicated region
  $region6: #{dissection_loss.1} parent=0 // pred_check
    _
  $region7: #{dissection_loss.1} parent=0 // pred_check_branch
    %20 = sbr.rel (0) target = $region9
  $region8: #{dissection_loss.1} parent=0 // pred_region
    %s21 = sadd.s32 0, 0
    %s22 = smul.u32 2, %s21
    %p23 = scmp.lt.s32.totalorder %s22, 1
    %s24 = scalar_select %p23, %s22, 1
    %s25 = smul.addr %s24, 8
    %s26 = scalar_lea.vmem %s1, %s25
    %s27 = sadd.s32 0, 0
    %s28 = smul.u32 2, %s27
  $region9: #{dissection_loss.1} parent=0 // pred_fallthru
    _
  %s29 = sadd.s32 0, 0
  %s30 = smul.u32 2, %s29
  %p31 = scmp.lt.s32.totalorder %s30, 1
  %s32 = scalar_select %p31, %s30, 1
  %s33 = smul.addr %s32, 8
  %s34 = scalar_lea.vmem %s0, %s33
  %s35 = sadd.s32 0, 0
  %s36 = smul.u32 2, %s35
  %p37 = scmp.lt.s32.totalorder %s36, 1
  %s38 = scalar_select %p37, %s36, 1
  %s39 = smul.addr %s38, 8
  %s40 = scalar_lea.vmem %s1, %s39
  %s41 = sadd.s32 0, 0
  %s42 = smul.u32 2, %s41
  %p43 = scmp.lt.s32.totalorder %s42, 1
  %s44 = scalar_select %p43, %s42, 1
  %s45 = smul.addr %s44, 8
  %s46 = scalar_lea.vmem %s0, %s45
  %s47 = sadd.s32 0, 0
  %s48 = smul.u32 2, %s47
  %s49 = sadd.s32 0, 0
  %s50 = smul.u32 2, %s49
  %p51 = scmp.lt.s32.totalorder %s50, 1
  %s52 = scalar_select %p51, %s50, 1
  %s53 = smul.addr %s52, 8
  %s54 = scalar_lea.vmem %s1, %s53
  %s55 = sadd.s32 0, 0
  %s56 = smul.u32 2, %s55
  %p57 = scmp.eq.s32.totalorder 0, 0
  // Predicated region
  $region10: #{dissection_loss.1} parent=0 // pred_check
    %p58 = pneg %p57
  $region11: #{dissection_loss.1} parent=0 // pred_check_branch
    %60 = sbr.rel (%p58) target = $region13
  $region12: #{dissection_loss.1} parent=0 // pred_region
    %61 = vst [vmem:[%s2] sm:$0xff] 0.0
    %62 = vst [vmem:[%s2 + $0x8] sm:$0xff] 0.0
    %63 = vst [vmem:[%s3] sm:$0xff] 0.0
    %64 = vst [vmem:[%s3 + $0x8] sm:$0xff] 0.0
  $region13: #{dissection_loss.1} parent=0 // pred_fallthru
    _
  %v65 = vld [vmem:[%s46] sm:$0xff]
  %v66 = vld [vmem:[%s46 + $0x8] sm:$0xff]
  %v67 = vld [vmem:[%s54] sm:$0xff]
  %v68 = vld [vmem:[%s54 + $0x8] sm:$0xff]
  %v69 = vmul.f32 %v65, %v67
  %v70 = vmul.f32 %v66, %v68
  %v71 = vld [vmem:[%s2] sm:$0xff]
  %v72 = vld [vmem:[%s2 + $0x8] sm:$0xff]
  %v73 = vadd.f32 %v69, 0.0
  %v74 = vadd.f32 %v70, 0.0
  %v75 = vadd.f32 %v71, %v73
  %v76 = vadd.f32 %v72, %v74
  %77 = vst [vmem:[%s2] sm:$0xff] %v75
  %78 = vst [vmem:[%s2 + $0x8] sm:$0xff] %v76
  %v79 = vld [vmem:[%s3] sm:$0xff]
  %v80 = vld [vmem:[%s3 + $0x8] sm:$0xff]
  %v81 = vadd.f32 %v67, 0.0
  %v82 = vadd.f32 %v68, 0.0
  %v83 = vadd.f32 %v79, %v81
  %v84 = vadd.f32 %v80, %v82
  %85 = vst [vmem:[%s3] sm:$0xff] %v83
  %86 = vst [vmem:[%s3 + $0x8] sm:$0xff] %v84
  // Predicated region
  $region14: #{dissection_loss.1} parent=0 // pred_check
    _
  $region15: #{dissection_loss.1} parent=0 // pred_check_branch
    %88 = sbr.rel (0) target = $region17
  $region16: #{dissection_loss.1} parent=0 // pred_region
    _
  $region17: #{dissection_loss.1} parent=0 // pred_fallthru
    _
  // Predicated region
  $region18: #{dissection_loss.1} parent=0 // pred_check
    _
  $region19: #{dissection_loss.1} parent=0 // pred_check_branch
    %90 = sbr.rel (0) target = $region21
  $region20: #{dissection_loss.1} parent=0 // pred_region
    _
  $region21: #{dissection_loss.1} parent=0 // pred_fallthru
    _
  // Predicated region
  $region22: #{dissection_loss.1} parent=0 // pred_check
    _
  $region23: #{dissection_loss.1} parent=0 // pred_check_branch
    %92 = sbr.rel (0) target = $region25
  $region24: #{dissection_loss.1} parent=0 // pred_region
    _
  $region25: #{dissection_loss.1} parent=0 // pred_fallthru
    _
  // Predicated region
  $region26: #{dissection_loss.1} parent=0 // pred_check
    _
  $region27: #{dissection_loss.1} parent=0 // pred_check_branch
    %94 = sbr.rel (0) target = $region29
  $region28: #{dissection_loss.1} parent=0 // pred_region
    _
  $region29: #{dissection_loss.1} parent=0 // pred_fallthru
    _

</llo_original>
